<compile_context>
chip_gen: v7x
topology: tpu7x:2x2x1
jax: 0.10.0
libtpu: 0.0.40
codegen_flags: <defaults>
</compile_context>

<pallas_src>
import functools

import jax
import jax.numpy as jnp
from jax.experimental import pallas as pl
from jax.experimental.pallas import tpu as pltpu


def _round_up(x, m):
    return ((x + m - 1) // m) * m


def _vmem_capacity_bytes():
    """Physical VMEM capacity; falls back to the smallest current part (v7x)."""
    default = 64 * 1024 * 1024
    try:
        info = pltpu.get_tpu_info()
        cap = int(getattr(info, "vmem_capacity_bytes", default))
        return cap if cap > 0 else default
    except Exception:
        return default


def _pad2(a, shape, dtype):
    out = jnp.zeros(shape, dtype)
    return out.at[: a.shape[0], : a.shape[1]].set(a.astype(dtype))


def _pad_row(v, width, dtype):
    out = jnp.zeros((1, width), dtype)
    return out.at[0, : v.shape[0]].set(v.astype(dtype))


def build_normalized_adjacency(edge_index, num_nodes):
    """Dense A_hat = D^{-1/2} (A + I) D^{-1/2} from a (2, E) edge list.

    PyG message-passing convention: edge_index[0] = source j, edge_index[1] =
    target i, so A[i, j] += 1 per edge j->i.  Duplicate edges count with
    multiplicity (matches PyG gcn_norm; no clamping).
    """
    src, dst = edge_index[0], edge_index[1]
    a = jnp.zeros((num_nodes, num_nodes), jnp.float32)
    a = a.at[dst, src].add(1.0)
    a = a + jnp.eye(num_nodes, dtype=jnp.float32)          # self-loops
    deg = jnp.sum(a, axis=1)
    d_inv_sqrt = jnp.where(deg > 0, jax.lax.rsqrt(deg), 0.0)
    return a * d_inv_sqrt[:, None] * d_inv_sqrt[None, :]


# ---------------------------------------------------------------------------
# Fused small-graph path: both layers in one pallas_call, A_hat resident.
# ---------------------------------------------------------------------------
def gcn_fused_kernel(a_ref, xw1_ref, b1_ref, w2_ref, b2_ref, o_ref, h1_ref):
    """Z = A @ relu(A @ XW1 + b1) @ W2 + b2 with A read from HBM once."""
    a = a_ref[...]
    h1 = jnp.dot(a, xw1_ref[...], preferred_element_type=jnp.float32)
    h1_ref[...] = jnp.maximum(h1 + b1_ref[...], 0.0).astype(h1_ref.dtype)
    xw2 = jnp.dot(h1_ref[...], w2_ref[...],
                  preferred_element_type=jnp.float32).astype(jnp.bfloat16)
    o_ref[...] = (jnp.dot(a, xw2, preferred_element_type=jnp.float32)
                  + b2_ref[...]).astype(o_ref.dtype)


def _gcn_fused(a_p, xw1_p, b1_p, w2_p, b2_p, *, out_dtype, vmem_limit):
    np_ = a_p.shape[0]
    hp = xw1_p.shape[1]
    cp = w2_p.shape[1]
    flops = 2 * np_ * np_ * hp + 2 * np_ * hp * cp + 2 * np_ * np_ * cp
    bytes_accessed = (a_p.size * a_p.dtype.itemsize
                      + xw1_p.size * xw1_p.dtype.itemsize
                      + w2_p.size * w2_p.dtype.itemsize
                      + b1_p.size * 4 + b2_p.size * 4 + np_ * cp * 4)
    vspec = pl.BlockSpec(memory_space=pltpu.MemorySpace.VMEM)
    return pl.pallas_call(
        gcn_fused_kernel,
        out_shape=jax.ShapeDtypeStruct((np_, cp), out_dtype),
        in_specs=[vspec, vspec, vspec, vspec, vspec],
        out_specs=vspec,
        scratch_shapes=[pltpu.VMEM((np_, hp), jnp.bfloat16)],
        compiler_params=pltpu.CompilerParams(vmem_limit_bytes=vmem_limit),
        cost_estimate=pl.CostEstimate(
            flops=int(flops), transcendentals=0,
            bytes_accessed=int(bytes_accessed)),
    )(a_p, xw1_p, b1_p, w2_p, b2_p)


# ---------------------------------------------------------------------------
# Tiled large-graph path: one GCN layer = [relu](A @ XW + b), (TM, TK) tiles.
# ---------------------------------------------------------------------------
def gcn_spmm_kernel(a_ref, xw_ref, b_ref, o_ref, acc_ref, *, relu):
    """One (TM, TK) step: accumulate A_tile @ XW_tile, finalize on last K."""
    k = pl.program_id(1)

    @pl.when(k == 0)
    def _():
        acc_ref[...] = jnp.zeros_like(acc_ref)

    acc_ref[...] += jnp.dot(a_ref[...], xw_ref[...],
                            preferred_element_type=jnp.float32)

    @pl.when(k == pl.num_programs(1) - 1)
    def _():
        out = acc_ref[...] + b_ref[...]
        if relu:
            out = jnp.maximum(out, 0.0)
        o_ref[...] = out.astype(o_ref.dtype)


def _pick_tiles(n_cols, h_pad, out_itemsize, budget):
    """Largest (TM, TK) whose full per-step VMEM footprint fits `budget`.

    Accounts for the double-buffered A tile, the XW contraction tile, the
    double-buffered output tile, the f32 accumulator scratch and the bias
    (feedback: budget everything, not just the A slab).
    """
    tm_cands = [t for t in (1024, 512, 256, 128) if t <= max(n_cols, 128)]
    tk_cands = sorted({t for t in (n_cols, 4096, 2048, 1024, 512, 256, 128)
                       if t <= n_cols and n_cols % t == 0}, reverse=True)
    for tm in tm_cands:
        for tk in tk_cands:
            a_b = 2 * tm * tk * 2                               # bf16, 2 bufs
            xw_b = (1 if tk == n_cols else 2) * tk * h_pad * 2  # bf16
            out_b = 2 * tm * h_pad * out_itemsize
            acc_b = tm * h_pad * 4
            bias_b = h_pad * 4
            if a_b + xw_b + out_b + acc_b + bias_b <= budget:
                return tm, tk
    return 128, 128


def _gcn_layer_tiled(a_p, xw_p, b_p, *, relu, out_dtype, tm, tk, vmem_limit):
    n_rows, n_cols = a_p.shape
    hp = xw_p.shape[1]
    n_k = n_cols // tk
    grid = (n_rows // tm, n_k)

    # Constant-index residents are fetched once; single-buffer them so their
    # VMEM goes to a larger streamed A tile instead.
    if n_k == 1:
        xw_spec = pl.BlockSpec((tk, hp), lambda i, k: (k, 0),
                               pipeline_mode=pl.Buffered(1))
    else:
        xw_spec = pl.BlockSpec((tk, hp), lambda i, k: (k, 0))
    b_spec = pl.BlockSpec((1, hp), lambda i, k: (0, 0),
                          pipeline_mode=pl.Buffered(1))

    flops = 2 * n_rows * n_cols * hp
    bytes_accessed = (a_p.size * a_p.dtype.itemsize
                      + xw_p.size * xw_p.dtype.itemsize
                      + b_p.size * b_p.dtype.itemsize
                      + n_rows * hp * jnp.dtype(out_dtype).itemsize)

    return pl.pallas_call(
        functools.partial(gcn_spmm_kernel, relu=relu),
        out_shape=jax.ShapeDtypeStruct((n_rows, hp), out_dtype),
        grid=grid,
        in_specs=[
            pl.BlockSpec((tm, tk), lambda i, k: (i, k)),  # streamed A_hat tile
            xw_spec,                                      # XW contraction tile
            b_spec,                                       # bias (resident)
        ],
        out_specs=pl.BlockSpec((tm, hp), lambda i, k: (i, 0)),
        scratch_shapes=[pltpu.VMEM((tm, hp), jnp.float32)],
        compiler_params=pltpu.CompilerParams(
            dimension_semantics=("parallel", "arbitrary"),
            vmem_limit_bytes=vmem_limit),
        cost_estimate=pl.CostEstimate(
            flops=int(flops), transcendentals=0,
            bytes_accessed=int(bytes_accessed)),
    )(a_p, xw_p, b_p)


# ---------------------------------------------------------------------------
# Encoder wrapper
# ---------------------------------------------------------------------------
def gcn_encoder(x, edge_index, w1, b1, w2, b2, *, force_tiled=False):
    n, _ = x.shape
    hidden = w1.shape[1]
    out_c = w2.shape[1]

    h_pad = _round_up(hidden, 128)
    c_pad = _round_up(out_c, 128)
    n_cols = _round_up(n, 128)

    cap = _vmem_capacity_bytes()
    vmem_limit = int(cap * 0.8)       # ~100 MiB on 128 MiB parts, ~51 MiB on v7x
    tile_budget = int(cap * 0.65)

    a_hat = build_normalized_adjacency(edge_index, n)

    # Hoisted feature transform: XW1 = X @ W1 computed once (f32) so the
    # Pallas kernels only compute A @ XW (+ bias).
    xw1 = jnp.dot(x.astype(jnp.float32), w1.astype(jnp.float32))

    b1_p = _pad_row(b1, h_pad, jnp.float32)
    b2_p = _pad_row(b2, c_pad, jnp.float32)

    fused_bytes = (n_cols * n_cols * 2        # A bf16
                   + 2 * n_cols * h_pad * 2   # XW1 + H1 scratch (bf16)
                   + h_pad * c_pad * 2        # W2 bf16
                   + n_cols * c_pad * 4       # Z f32 output
                   + n_cols * h_pad * 4       # layer-1 f32 temp
                   + n_cols * c_pad * 4       # H1@W2 f32 temp
                   + (h_pad + c_pad) * 4)     # biases
    if (not force_tiled) and fused_bytes <= int(cap * 0.6):
        # Small/medium graph: fuse both layers, A_hat read from HBM once.
        a_p = _pad2(a_hat, (n_cols, n_cols), jnp.bfloat16)
        xw1_p = _pad2(xw1, (n_cols, h_pad), jnp.bfloat16)
        w2_p = _pad2(w2, (h_pad, c_pad), jnp.bfloat16)
        z = _gcn_fused(a_p, xw1_p, b1_p, w2_p, b2_p,
                       out_dtype=jnp.float32, vmem_limit=vmem_limit)
        return z[:n, :out_c]

    # Large graph: two tiled passes over A_hat with a K-accumulated grid.
    tm, tk = _pick_tiles(n_cols, max(h_pad, c_pad), 4, tile_budget)
    n_rows = _round_up(n, tm)     # rows padded to TM; columns only to 128/TK

    a_p = _pad2(a_hat, (n_rows, n_cols), jnp.bfloat16)
    xw1_p = _pad2(xw1, (n_cols, h_pad), jnp.bfloat16)

    h1 = _gcn_layer_tiled(a_p, xw1_p, b1_p, relu=True,
                          out_dtype=jnp.bfloat16, tm=tm, tk=tk,
                          vmem_limit=vmem_limit)

    # Hoisted layer-2 feature transform: XW2 = H1 @ W2 (only the first n_cols
    # rows of H1 are reachable through A's non-zero columns).
    w2_p = _pad2(w2, (h_pad, c_pad), jnp.float32)
    xw2 = jnp.dot(h1[:n_cols].astype(jnp.float32), w2_p).astype(jnp.bfloat16)

    z = _gcn_layer_tiled(a_p, xw2, b2_p, relu=False,
                         out_dtype=jnp.float32, tm=tm, tk=tk,
                         vmem_limit=vmem_limit)
    return z[:n, :out_c]


def init_params(key, in_channels, out_channels):
    """Deterministic Glorot-style init; biases zero (PyG GCNConv default)."""
    hidden = 2 * out_channels
    k1, k2 = jax.random.split(key)
    w1 = jax.random.uniform(
        k1, (in_channels, hidden), jnp.float32,
        minval=-1.0, maxval=1.0) * jnp.sqrt(6.0 / (in_channels + hidden))
    w2 = jax.random.uniform(
        k2, (hidden, out_channels), jnp.float32,
        minval=-1.0, maxval=1.0) * jnp.sqrt(6.0 / (hidden + out_channels))
    b1 = jnp.zeros((hidden,), jnp.float32)
    b2 = jnp.zeros((out_channels,), jnp.float32)
    return w1, b1, w2, b2


if __name__ == "__main__":
    N = 64            # number of nodes
    IN_CHANNELS = 16
    OUT_CHANNELS = 8  # encoder output dim (hidden = 2*OUT_CHANNELS = 16)

    key = jax.random.PRNGKey(0)
    kx, kp = jax.random.split(key)

    # Node features (N, F)
    x = jax.random.normal(kx, (N, IN_CHANNELS), jnp.float32)

    # Simple undirected ring graph: edges i<->(i+1) mod N, shape (2, 2N)
    idx = jnp.arange(N, dtype=jnp.int32)
    nxt = (idx + 1) % N
    src = jnp.concatenate([idx, nxt])
    dst = jnp.concatenate([nxt, idx])
    edge_index = jnp.stack([src, dst], axis=0)

    w1, b1, w2, b2 = init_params(kp, IN_CHANNELS, OUT_CHANNELS)

    # Fused path (default for this size) and the tiled large-graph path.
    z_fused = gcn_encoder(x, edge_index, w1, b1, w2, b2)
    z_tiled = gcn_encoder(x, edge_index, w1, b1, w2, b2, force_tiled=True)
    jax.block_until_ready((z_fused, z_tiled))

    # Pure-JAX f32 reference (kernels compute in bf16 with f32 accumulation).
    a_hat = build_normalized_adjacency(edge_index, N)
    h1_ref = jnp.maximum(a_hat @ (x @ w1) + b1, 0.0)
    z_ref = a_hat @ (h1_ref @ w2) + b2
    assert z_fused.shape == (N, OUT_CHANNELS)
    assert z_tiled.shape == (N, OUT_CHANNELS)
    assert jnp.allclose(z_fused, z_ref, atol=5e-2, rtol=5e-2)
    assert jnp.allclose(z_tiled, z_ref, atol=5e-2, rtol=5e-2)

    print("KERNEL_OK")
</pallas_src>

<mosaic_0001>
module attributes {stable_mosaic.version = 11 : i64} {
  func.func @gcn_fused_kernel(%arg0: memref<128x128xbf16, #tpu.memory_space<vmem>>, %arg1: memref<128x128xbf16, #tpu.memory_space<vmem>>, %arg2: memref<1x128xf32, #tpu.memory_space<vmem>>, %arg3: memref<128x128xbf16, #tpu.memory_space<vmem>>, %arg4: memref<1x128xf32, #tpu.memory_space<vmem>>, %arg5: memref<128x128xf32, #tpu.memory_space<vmem>>, %arg6: memref<128x128xbf16, #tpu.memory_space<vmem>>) attributes {dimension_semantics = [], scalar_prefetch = 0 : i64, scratch_operands = 1 : i64, tpu.core_type = #tpu.core_type<tc>} {
    %c0 = arith.constant 0 : index
    %c0_0 = arith.constant 0 : index
    %0 = vector.load %arg0[%c0, %c0_0] : memref<128x128xbf16, #tpu.memory_space<vmem>>, vector<128x128xbf16>
    %c0_1 = arith.constant 0 : index
    %c0_2 = arith.constant 0 : index
    %1 = vector.load %arg1[%c0_1, %c0_2] : memref<128x128xbf16, #tpu.memory_space<vmem>>, vector<128x128xbf16>
    %cst = arith.constant dense<0.000000e+00> : vector<128x128xf32>
    %2 = tpu.matmul %0, %1, %cst {dimension_numbers = #tpu.dot_dimension_numbers<[1], [0], [0], [1], [0, 0, 1, 1], [], []>} : vector<128x128xbf16>, vector<128x128xbf16>, vector<128x128xf32> -> vector<128x128xf32>
    %c0_3 = arith.constant 0 : index
    %c0_4 = arith.constant 0 : index
    %3 = vector.load %arg2[%c0_3, %c0_4] : memref<1x128xf32, #tpu.memory_space<vmem>>, vector<1x128xf32>
    %4 = vector.broadcast %3 : vector<1x128xf32> to vector<128x128xf32>
    %5 = arith.addf %2, %4 : vector<128x128xf32>
    %cst_5 = arith.constant 0.000000e+00 : f32
    %6 = vector.broadcast %cst_5 : f32 to vector<128x128xf32>
    %7 = arith.maximumf %5, %6 : vector<128x128xf32>
    %8 = arith.truncf %7 : vector<128x128xf32> to vector<128x128xbf16>
    %c0_6 = arith.constant 0 : index
    %c0_7 = arith.constant 0 : index
    %9 = vector.load %arg6[%c0_6, %c0_7] : memref<128x128xbf16, #tpu.memory_space<vmem>>, vector<128x128xbf16>
    tpu.vector_store %arg6[%c0_6, %c0_7], %8 {strides = array<i32>} : memref<128x128xbf16, #tpu.memory_space<vmem>>, vector<128x128xbf16>,
    %c0_8 = arith.constant 0 : index
    %c0_9 = arith.constant 0 : index
    %10 = vector.load %arg6[%c0_8, %c0_9] : memref<128x128xbf16, #tpu.memory_space<vmem>>, vector<128x128xbf16>
    %c0_10 = arith.constant 0 : index
    %c0_11 = arith.constant 0 : index
    %11 = vector.load %arg3[%c0_10, %c0_11] : memref<128x128xbf16, #tpu.memory_space<vmem>>, vector<128x128xbf16>
    %cst_12 = arith.constant dense<0.000000e+00> : vector<128x128xf32>
    %12 = tpu.matmul %10, %11, %cst_12 {dimension_numbers = #tpu.dot_dimension_numbers<[1], [0], [0], [1], [0, 0, 1, 1], [], []>} : vector<128x128xbf16>, vector<128x128xbf16>, vector<128x128xf32> -> vector<128x128xf32>
    %13 = arith.truncf %12 : vector<128x128xf32> to vector<128x128xbf16>
    %cst_13 = arith.constant dense<0.000000e+00> : vector<128x128xf32>
    %14 = tpu.matmul %0, %13, %cst_13 {dimension_numbers = #tpu.dot_dimension_numbers<[1], [0], [0], [1], [0, 0, 1, 1], [], []>} : vector<128x128xbf16>, vector<128x128xbf16>, vector<128x128xf32> -> vector<128x128xf32>
    %c0_14 = arith.constant 0 : index
    %c0_15 = arith.constant 0 : index
    %15 = vector.load %arg4[%c0_14, %c0_15] : memref<1x128xf32, #tpu.memory_space<vmem>>, vector<1x128xf32>
    %16 = vector.broadcast %15 : vector<1x128xf32> to vector<128x128xf32>
    %17 = arith.addf %14, %16 : vector<128x128xf32>
    %c0_16 = arith.constant 0 : index
    %c0_17 = arith.constant 0 : index
    %18 = vector.load %arg5[%c0_16, %c0_17] : memref<128x128xf32, #tpu.memory_space<vmem>>, vector<128x128xf32>
    tpu.vector_store %arg5[%c0_16, %c0_17], %17 {strides = array<i32>} : memref<128x128xf32, #tpu.memory_space<vmem>>, vector<128x128xf32>,
    return
  }
}

</mosaic_0001>

<llo_original>
// kernel: tpu_custom_call.1
$region0: #{tpu_custom_call.1}
  #allocation0 [shape = 'u32[]', space=smem, size = 0x4, offset = 0x4, fixed_abs, tag = 'smem constant byte address 0x4 - core index']
  #allocation1 [shape = 'u32[144,128]{1,0:T(1,128)}', space=vmem, size = 0x12000, scoped, tag = 'internal scratch']
  #allocation2 [shape = 'bf16[128,128]{1,0:T(16,128)(2,1)}', space=vmem, size = 0x8000, scoped, tag = 'scratch operand']
  %s0 = inlined_call_operand.hbm [shape: bf16[128,128], index: 0, kind: input, shape index: {}]
  %s1 = inlined_call_operand.hbm [shape: bf16[128,128], index: 1, kind: input, shape index: {}]
  %s2 = inlined_call_operand.vmem [shape: f32[1,128], index: 2, kind: input, shape index: {}]
  %s3 = inlined_call_operand.hbm [shape: bf16[128,128], index: 3, kind: input, shape index: {}]
  %s4 = inlined_call_operand.vmem [shape: f32[1,128], index: 4, kind: input, shape index: {}]
  %s5 = inlined_call_operand.hbm [shape: f32[128,128], index: 5, kind: output, shape index: {}]
  %s6 = sld [smem:[#allocation0]]
  $region42: #{tpu_custom_call.1} parent=0
    _
  %s8 = ssub.s32 1, %s6
  %s9 = scalar_select 0, %s8, %s6
  $region1: #{tpu_custom_call.1} parent=0
    #allocation3 [shape = 'u8[32768]{0}', space=vmem, size = 0x8000, scoped, tag = 'input window, operand 0, single buffered']
    #allocation4 [shape = 's32[1]{0}', space=sflag, size = 0x4, scoped, tag = 'scoped memory for tpu_custom_call.1']
    #allocation5 [shape = 's32[1]{0}', space=sflag, size = 0x4, scoped, tag = 'scoped memory for tpu_custom_call.1']
    #allocation6 [shape = 'u8[32768]{0}', space=vmem, size = 0x8000, scoped, tag = 'input window, operand 1, single buffered']
    #allocation7 [shape = 's32[1]{0}', space=sflag, size = 0x4, scoped, tag = 'scoped memory for tpu_custom_call.1']
    #allocation8 [shape = 'u8[32768]{0}', space=vmem, size = 0x8000, scoped, tag = 'input window, operand 3, single buffered']
    #allocation9 [shape = 'u8[65536]{0}', space=vmem, size = 0x10000, scoped, tag = 'output window, operand 0, single buffered']
    %10 = vsyncpa [#allocation4], 0
    %11 = vsyncpa [#allocation7], 0
    %12 = vsyncpa [#allocation5], 0
    // Predicated region
    $region2: #{tpu_custom_call.1} parent=1 // pred_check
      _
    $region3: #{tpu_custom_call.1} parent=1 // pred_check_branch
      %14 = sbr.rel (0) target = $region5
    $region4: #{tpu_custom_call.1} parent=1 // pred_region
      %s16 = ssub.s32 1024, 1024
      %17 = vsyncadd [#allocation4], %s16
      %s18 = sshll.u32 [#allocation3], 4
      %s19 = int_to_ptr.vmem [resolvable:$true] %s18
      %24 = dma.hbm_to_vmem [thread:$0]  %s0, 1024, %s19, [#allocation4], 64, 64, 4
    $region5: #{tpu_custom_call.1} parent=1 // pred_fallthru
      _
    // Predicated region
    $region6: #{tpu_custom_call.1} parent=1 // pred_check
      _
    $region7: #{tpu_custom_call.1} parent=1 // pred_check_branch
      %26 = sbr.rel (0) target = $region9
    $region8: #{tpu_custom_call.1} parent=1 // pred_region
      %s28 = ssub.s32 1024, 1024
      %29 = vsyncadd [#allocation7], %s28
      %s30 = sshll.u32 [#allocation6], 4
      %s31 = int_to_ptr.vmem [resolvable:$true] %s30
      %36 = dma.hbm_to_vmem [thread:$0]  %s1, 1024, %s31, [#allocation7], 64, 64, 4
    $region9: #{tpu_custom_call.1} parent=1 // pred_fallthru
      _
    // Predicated region
    $region10: #{tpu_custom_call.1} parent=1 // pred_check
      _
    $region11: #{tpu_custom_call.1} parent=1 // pred_check_branch
      %38 = sbr.rel (0) target = $region13
    $region12: #{tpu_custom_call.1} parent=1 // pred_region
      _
    $region13: #{tpu_custom_call.1} parent=1 // pred_fallthru
      _
    // Predicated region
    $region14: #{tpu_custom_call.1} parent=1 // pred_check
      _
    $region15: #{tpu_custom_call.1} parent=1 // pred_check_branch
      %40 = sbr.rel (0) target = $region17
    $region16: #{tpu_custom_call.1} parent=1 // pred_region
      %s42 = ssub.s32 1024, 1024
      %43 = vsyncadd [#allocation7], %s42
      %s44 = sshll.u32 [#allocation8], 4
      %s45 = int_to_ptr.vmem [resolvable:$true] %s44
      %50 = dma.hbm_to_vmem [thread:$0]  %s3, 1024, %s45, [#allocation7], 64, 64, 4
    $region17: #{tpu_custom_call.1} parent=1 // pred_fallthru
      _
    // Predicated region
    $region18: #{tpu_custom_call.1} parent=1 // pred_check
      _
    $region19: #{tpu_custom_call.1} parent=1 // pred_check_branch
      %52 = sbr.rel (0) target = $region21
    $region20: #{tpu_custom_call.1} parent=1 // pred_region
      _
    $region21: #{tpu_custom_call.1} parent=1 // pred_fallthru
      _
    // Predicated region
    $region22: #{tpu_custom_call.1} parent=1 // pred_check
      _
    $region23: #{tpu_custom_call.1} parent=1 // pred_check_branch
      %54 = sbr.rel (0) target = $region25
    $region24: #{tpu_custom_call.1} parent=1 // pred_region
      %55 = dma.done [#allocation4], 1024
    $region25: #{tpu_custom_call.1} parent=1 // pred_fallthru
      _
    // Predicated region
    $region26: #{tpu_custom_call.1} parent=1 // pred_check
      _
    $region27: #{tpu_custom_call.1} parent=1 // pred_check_branch
      %57 = sbr.rel (0) target = $region29
    $region28: #{tpu_custom_call.1} parent=1 // pred_region
      %58 = dma.done [#allocation7], 1024
    $region29: #{tpu_custom_call.1} parent=1 // pred_fallthru
      _
    // Predicated region
    $region30: #{tpu_custom_call.1} parent=1 // pred_check
      _
    $region31: #{tpu_custom_call.1} parent=1 // pred_check_branch
      %60 = sbr.rel (0) target = $region33
    $region32: #{tpu_custom_call.1} parent=1 // pred_region
      %61 = dma.done [#allocation7], 1024
    $region33: #{tpu_custom_call.1} parent=1 // pred_fallthru
      _
    %v63 = vld [vmem:[#allocation3] sm:$0xf]
    %v64 = vld [vmem:[#allocation3 + $0x4] sm:$0xf]
    %v65 = vld [vmem:[#allocation3 + $0x8] sm:$0xf]
    %v66 = vld [vmem:[#allocation3 + $0xc] sm:$0xf]
    %v67 = vld [vmem:[#allocation3 + $0x10] sm:$0xf]
    %v68 = vld [vmem:[#allocation3 + $0x14] sm:$0xf]
    %v69 = vld [vmem:[#allocation3 + $0x18] sm:$0xf]
    %v70 = vld [vmem:[#allocation3 + $0x1c] sm:$0xf]
    %v71 = vld [vmem:[#allocation3 + $0x20] sm:$0xf]
    %v72 = vld [vmem:[#allocation3 + $0x24] sm:$0xf]
    %v73 = vld [vmem:[#allocation3 + $0x28] sm:$0xf]
    %v74 = vld [vmem:[#allocation3 + $0x2c] sm:$0xf]
    %v75 = vld [vmem:[#allocation3 + $0x30] sm:$0xf]
    %v76 = vld [vmem:[#allocation3 + $0x34] sm:$0xf]
    %v77 = vld [vmem:[#allocation3 + $0x38] sm:$0xf]
    %v78 = vld [vmem:[#allocation3 + $0x3c] sm:$0xf]
    %v79 = vld [vmem:[#allocation6] sm:$0xf]
    %v80 = vld [vmem:[#allocation6 + $0x4] sm:$0xf]
    %v81 = vld [vmem:[#allocation6 + $0x8] sm:$0xf]
    %v82 = vld [vmem:[#allocation6 + $0xc] sm:$0xf]
    %v83 = vld [vmem:[#allocation6 + $0x10] sm:$0xf]
    %v84 = vld [vmem:[#allocation6 + $0x14] sm:$0xf]
    %v85 = vld [vmem:[#allocation6 + $0x18] sm:$0xf]
    %v86 = vld [vmem:[#allocation6 + $0x1c] sm:$0xf]
    %v87 = vld [vmem:[#allocation6 + $0x20] sm:$0xf]
    %v88 = vld [vmem:[#allocation6 + $0x24] sm:$0xf]
    %v89 = vld [vmem:[#allocation6 + $0x28] sm:$0xf]
    %v90 = vld [vmem:[#allocation6 + $0x2c] sm:$0xf]
    %v91 = vld [vmem:[#allocation6 + $0x30] sm:$0xf]
    %v92 = vld [vmem:[#allocation6 + $0x34] sm:$0xf]
    %v93 = vld [vmem:[#allocation6 + $0x38] sm:$0xf]
    %v94 = vld [vmem:[#allocation6 + $0x3c] sm:$0xf]
    %v95 = vld [vmem:[%s2] sm:$0x1]
    %v97 = vlaneseq
    %v98 = vshrl.u32 %v97, 7
    %v99 = vsub.s32 0, %v98
    %v100 = vrot.slane %v95, %v99
    %v118 = vunpack.c.l.b16 %v63
    %v119 = vunpack.c.l.b16 %v64
    %v120 = vunpack.c.l.b16 %v65
    %v121 = vunpack.c.l.b16 %v66
    %v122 = vunpack.c.l.b16 %v67
    %v123 = vunpack.c.l.b16 %v68
    %v124 = vunpack.c.l.b16 %v69
    %v125 = vunpack.c.l.b16 %v70
    %v126 = vunpack.c.l.b16 %v71
    %v127 = vunpack.c.l.b16 %v72
    %v128 = vunpack.c.l.b16 %v73
    %v129 = vunpack.c.l.b16 %v74
    %v130 = vunpack.c.l.b16 %v75
    %v131 = vunpack.c.l.b16 %v76
    %v132 = vunpack.c.l.b16 %v77
    %v133 = vunpack.c.l.b16 %v78
    %v134 = vpack.c.b16 %v119, %v118
    %v135 = vpack.c.b16 %v121, %v120
    %v136 = vpack.c.b16 %v123, %v122
    %v137 = vpack.c.b16 %v125, %v124
    %v138 = vpack.c.b16 %v127, %v126
    %v139 = vpack.c.b16 %v129, %v128
    %v140 = vpack.c.b16 %v131, %v130
    %v141 = vpack.c.b16 %v133, %v132
    %v166 = vunpack.c.l.b16 %v79
    %v167 = vunpack.c.l.b16 %v80
    %v168 = vunpack.c.l.b16 %v81
    %v169 = vunpack.c.l.b16 %v82
    %v170 = vunpack.c.l.b16 %v83
    %v171 = vunpack.c.l.b16 %v84
    %v172 = vunpack.c.l.b16 %v85
    %v173 = vunpack.c.l.b16 %v86
    %v174 = vunpack.c.l.b16 %v87
    %v175 = vunpack.c.l.b16 %v88
    %v176 = vunpack.c.l.b16 %v89
    %v177 = vunpack.c.l.b16 %v90
    %v178 = vunpack.c.l.b16 %v91
    %v179 = vunpack.c.l.b16 %v92
    %v180 = vunpack.c.l.b16 %v93
    %v181 = vunpack.c.l.b16 %v94
    %v182 = vpack.c.b16 %v167, %v166
    %v183 = vpack.c.b16 %v169, %v168
    %v184 = vpack.c.b16 %v171, %v170
    %v185 = vpack.c.b16 %v173, %v172
    %v186 = vpack.c.b16 %v175, %v174
    %v187 = vpack.c.b16 %v177, %v176
    %v188 = vpack.c.b16 %v179, %v178
    %v189 = vpack.c.b16 %v181, %v180
    %198 = vmatprep.subr.bf16.mxu0 0
    %199 = vmatpush1.bf16.msra.mxu0 %v182
    %200 = vmatprep.subr.bf16.mxu0 0
    %201 = vmatpush1.bf16.msra.mxu0 %v183
    %202 = vmatprep.subr.bf16.mxu0 0
    %203 = vmatpush1.bf16.msra.mxu0 %v184
    %204 = vmatprep.subr.bf16.mxu0 0
    %205 = vmatpush1.bf16.msra.mxu0 %v185
    %206 = vmatprep.subr.bf16.mxu0 0
    %207 = vmatpush1.bf16.msra.mxu0 %v186
    %208 = vmatprep.subr.bf16.mxu0 0
    %209 = vmatpush1.bf16.msra.mxu0 %v187
    %210 = vmatprep.subr.bf16.mxu0 0
    %211 = vmatpush1.bf16.msra.mxu0 %v188
    %212 = vmatprep.subr.bf16.mxu0 0
    %213 = vmatpush1.bf16.msra.mxu0 %v189
    %214 = vmatprep.subr.bf16.mxu0 0
    %215 = vmatpush1.bf16.msra.mxu0 0
    %216 = vmatprep.subr.bf16.mxu0 0
    %217 = vmatpush1.bf16.msra.mxu0 0
    %218 = vmatprep.subr.bf16.mxu0 0
    %219 = vmatpush1.bf16.msra.mxu0 0
    %220 = vmatprep.subr.bf16.mxu0 0
    %221 = vmatpush1.bf16.msra.mxu0 0
    %222 = vmatprep.subr.bf16.mxu0 0
    %223 = vmatpush1.bf16.msra.mxu0 0
    %224 = vmatprep.subr.bf16.mxu0 0
    %225 = vmatpush1.bf16.msra.mxu0 0
    %226 = vmatprep.subr.bf16.mxu0 0
    %227 = vmatpush1.bf16.msra.mxu0 0
    %228 = vmatprep.subr.bf16.mxu0 0
    %229 = vmatpush1.bf16.msra.mxu0 0
    %230 = vmatprep.mubr.bf16.mxu0 0
    %231 = vmatmul.mubr.bf16.gmra.mrb[0].mxu0 %v134
    %v232 = vpop.f32.mrb[0].mxu0
    %v233 = vadd.f32 %v100, %v232
    %v234 = vpop.f32.mrb[0].mxu0
    %v235 = vpop.f32.mrb[0].mxu0
    %v236 = vadd.f32 %v100, %v235
    %v237 = vpop.f32.mrb[0].mxu0
    %238 = vmatprep.mubr.bf16.mxu0 0
    %239 = vmatmul.mubr.bf16.gmra.mrb[0].mxu0 %v135
    %v240 = vpop.f32.mrb[0].mxu0
    %v241 = vadd.f32 %v100, %v240
    %v242 = vpop.f32.mrb[0].mxu0
    %v243 = vpop.f32.mrb[0].mxu0
    %v244 = vadd.f32 %v100, %v243
    %v245 = vpop.f32.mrb[0].mxu0
    %246 = vmatprep.mubr.bf16.mxu0 0
    %247 = vmatmul.mubr.bf16.gmra.mrb[0].mxu0 %v136
    %v248 = vpop.f32.mrb[0].mxu0
    %v249 = vadd.f32 %v100, %v248
    %v250 = vpop.f32.mrb[0].mxu0
    %v251 = vpop.f32.mrb[0].mxu0
    %v252 = vadd.f32 %v100, %v251
    %v253 = vpop.f32.mrb[0].mxu0
    %254 = vmatprep.mubr.bf16.mxu0 0
    %255 = vmatmul.mubr.bf16.gmra.mrb[0].mxu0 %v137
    %v256 = vpop.f32.mrb[0].mxu0
    %v257 = vadd.f32 %v100, %v256
    %v258 = vpop.f32.mrb[0].mxu0
    %v259 = vpop.f32.mrb[0].mxu0
    %v260 = vadd.f32 %v100, %v259
    %v261 = vpop.f32.mrb[0].mxu0
    %262 = vmatprep.mubr.bf16.mxu0 0
    %263 = vmatmul.mubr.bf16.gmra.mrb[0].mxu0 %v138
    %v264 = vpop.f32.mrb[0].mxu0
    %v265 = vadd.f32 %v100, %v264
    %v266 = vpop.f32.mrb[0].mxu0
    %v267 = vpop.f32.mrb[0].mxu0
    %v268 = vadd.f32 %v100, %v267
    %v269 = vpop.f32.mrb[0].mxu0
    %270 = vmatprep.mubr.bf16.mxu0 0
    %271 = vmatmul.mubr.bf16.gmra.mrb[0].mxu0 %v139
    %v272 = vpop.f32.mrb[0].mxu0
    %v273 = vadd.f32 %v100, %v272
    %v274 = vpop.f32.mrb[0].mxu0
    %v275 = vpop.f32.mrb[0].mxu0
    %v276 = vadd.f32 %v100, %v275
    %v277 = vpop.f32.mrb[0].mxu0
    %278 = vmatprep.mubr.bf16.mxu0 0
    %279 = vmatmul.mubr.bf16.gmra.mrb[0].mxu0 %v140
    %v280 = vpop.f32.mrb[0].mxu0
    %v281 = vadd.f32 %v100, %v280
    %v282 = vpop.f32.mrb[0].mxu0
    %v283 = vpop.f32.mrb[0].mxu0
    %v284 = vadd.f32 %v100, %v283
    %v285 = vpop.f32.mrb[0].mxu0
    %286 = vmatprep.mubr.bf16.mxu0 0
    %287 = vmatmul.mubr.bf16.gmra.mrb[0].mxu0 %v141
    %v288 = vpop.f32.mrb[0].mxu0
    %v289 = vadd.f32 %v100, %v288
    %v290 = vpop.f32.mrb[0].mxu0
    %v291 = vpop.f32.mrb[0].mxu0
    %v292 = vadd.f32 %v100, %v291
    %v293 = vpop.f32.mrb[0].mxu0
    %294 = vdwg.mxu0
    %v295 = vmax.f32 %v233, 0.0
    %v296 = vmax.f32 %v236, 0.0
    %v297 = vmax.f32 %v241, 0.0
    %v298 = vmax.f32 %v244, 0.0
    %v299 = vmax.f32 %v249, 0.0
    %v300 = vmax.f32 %v252, 0.0
    %v301 = vmax.f32 %v257, 0.0
    %v302 = vmax.f32 %v260, 0.0
    %v303 = vmax.f32 %v265, 0.0
    %v304 = vmax.f32 %v268, 0.0
    %v305 = vmax.f32 %v273, 0.0
    %v306 = vmax.f32 %v276, 0.0
    %v307 = vmax.f32 %v281, 0.0
    %v308 = vmax.f32 %v284, 0.0
    %v309 = vmax.f32 %v289, 0.0
    %v310 = vmax.f32 %v292, 0.0
    %v311 = vpack.c.bf16 %v296, %v295
    %v312 = vpack.c.bf16 %v298, %v297
    %v313 = vpack.c.bf16 %v300, %v299
    %v314 = vpack.c.bf16 %v302, %v301
    %v315 = vpack.c.bf16 %v304, %v303
    %v316 = vpack.c.bf16 %v306, %v305
    %v317 = vpack.c.bf16 %v308, %v307
    %v318 = vpack.c.bf16 %v310, %v309
    %319 = vst [vmem:[#allocation2] sm:$0xff] %v311
    %320 = vst [vmem:[#allocation2 + $0x8] sm:$0xff] %v312
    %321 = vst [vmem:[#allocation2 + $0x10] sm:$0xff] %v313
    %322 = vst [vmem:[#allocation2 + $0x18] sm:$0xff] %v314
    %323 = vst [vmem:[#allocation2 + $0x20] sm:$0xff] %v315
    %324 = vst [vmem:[#allocation2 + $0x28] sm:$0xff] %v316
    %325 = vst [vmem:[#allocation2 + $0x30] sm:$0xff] %v317
    %326 = vst [vmem:[#allocation2 + $0x38] sm:$0xff] %v318
    %v327 = vld [vmem:[#allocation2] sm:$0xff]
    %v328 = vld [vmem:[#allocation2 + $0x8] sm:$0xff]
    %v329 = vld [vmem:[#allocation2 + $0x10] sm:$0xff]
    %v330 = vld [vmem:[#allocation2 + $0x18] sm:$0xff]
    %v331 = vld [vmem:[#allocation2 + $0x20] sm:$0xff]
    %v332 = vld [vmem:[#allocation2 + $0x28] sm:$0xff]
    %v333 = vld [vmem:[#allocation2 + $0x30] sm:$0xff]
    %v334 = vld [vmem:[#allocation2 + $0x38] sm:$0xff]
    %v335 = vld [vmem:[#allocation8] sm:$0xf]
    %v336 = vld [vmem:[#allocation8 + $0x4] sm:$0xf]
    %v337 = vld [vmem:[#allocation8 + $0x8] sm:$0xf]
    %v338 = vld [vmem:[#allocation8 + $0xc] sm:$0xf]
    %v339 = vld [vmem:[#allocation8 + $0x10] sm:$0xf]
    %v340 = vld [vmem:[#allocation8 + $0x14] sm:$0xf]
    %v341 = vld [vmem:[#allocation8 + $0x18] sm:$0xf]
    %v342 = vld [vmem:[#allocation8 + $0x1c] sm:$0xf]
    %v343 = vld [vmem:[#allocation8 + $0x20] sm:$0xf]
    %v344 = vld [vmem:[#allocation8 + $0x24] sm:$0xf]
    %v345 = vld [vmem:[#allocation8 + $0x28] sm:$0xf]
    %v346 = vld [vmem:[#allocation8 + $0x2c] sm:$0xf]
    %v347 = vld [vmem:[#allocation8 + $0x30] sm:$0xf]
    %v348 = vld [vmem:[#allocation8 + $0x34] sm:$0xf]
    %v349 = vld [vmem:[#allocation8 + $0x38] sm:$0xf]
    %v350 = vld [vmem:[#allocation8 + $0x3c] sm:$0xf]
    %v367 = vunpack.c.l.b16 %v335
    %v368 = vunpack.c.l.b16 %v336
    %v369 = vunpack.c.l.b16 %v337
    %v370 = vunpack.c.l.b16 %v338
    %v371 = vunpack.c.l.b16 %v339
    %v372 = vunpack.c.l.b16 %v340
    %v373 = vunpack.c.l.b16 %v341
    %v374 = vunpack.c.l.b16 %v342
    %v375 = vunpack.c.l.b16 %v343
    %v376 = vunpack.c.l.b16 %v344
    %v377 = vunpack.c.l.b16 %v345
    %v378 = vunpack.c.l.b16 %v346
    %v379 = vunpack.c.l.b16 %v347
    %v380 = vunpack.c.l.b16 %v348
    %v381 = vunpack.c.l.b16 %v349
    %v382 = vunpack.c.l.b16 %v350
    %v383 = vpack.c.b16 %v368, %v367
    %v384 = vpack.c.b16 %v370, %v369
    %v385 = vpack.c.b16 %v372, %v371
    %v386 = vpack.c.b16 %v374, %v373
    %v387 = vpack.c.b16 %v376, %v375
    %v388 = vpack.c.b16 %v378, %v377
    %v389 = vpack.c.b16 %v380, %v379
    %v390 = vpack.c.b16 %v382, %v381
    %399 = vmatprep.subr.bf16.mxu0 0
    %400 = vmatpush1.bf16.msra.mxu0 %v383
    %401 = vmatprep.subr.bf16.mxu0 0
    %402 = vmatpush1.bf16.msra.mxu0 %v384
    %403 = vmatprep.subr.bf16.mxu0 0
    %404 = vmatpush1.bf16.msra.mxu0 %v385
    %405 = vmatprep.subr.bf16.mxu0 0
    %406 = vmatpush1.bf16.msra.mxu0 %v386
    %407 = vmatprep.subr.bf16.mxu0 0
    %408 = vmatpush1.bf16.msra.mxu0 %v387
    %409 = vmatprep.subr.bf16.mxu0 0
    %410 = vmatpush1.bf16.msra.mxu0 %v388
    %411 = vmatprep.subr.bf16.mxu0 0
    %412 = vmatpush1.bf16.msra.mxu0 %v389
    %413 = vmatprep.subr.bf16.mxu0 0
    %414 = vmatpush1.bf16.msra.mxu0 %v390
    %415 = vmatprep.subr.bf16.mxu0 0
    %416 = vmatpush1.bf16.msra.mxu0 0
    %417 = vmatprep.subr.bf16.mxu0 0
    %418 = vmatpush1.bf16.msra.mxu0 0
    %419 = vmatprep.subr.bf16.mxu0 0
    %420 = vmatpush1.bf16.msra.mxu0 0
    %421 = vmatprep.subr.bf16.mxu0 0
    %422 = vmatpush1.bf16.msra.mxu0 0
    %423 = vmatprep.subr.bf16.mxu0 0
    %424 = vmatpush1.bf16.msra.mxu0 0
    %425 = vmatprep.subr.bf16.mxu0 0
    %426 = vmatpush1.bf16.msra.mxu0 0
    %427 = vmatprep.subr.bf16.mxu0 0
    %428 = vmatpush1.bf16.msra.mxu0 0
    %429 = vmatprep.subr.bf16.mxu0 0
    %430 = vmatpush1.bf16.msra.mxu0 0
    %431 = vmatprep.mubr.bf16.mxu0 0
    %432 = vmatmul.mubr.bf16.gmra.mrb[0].mxu0 %v327
    %v433 = vpop.f32.mrb[0].mxu0
    %v434 = vadd.f32 0.0, %v433
    %v435 = vpop.f32.mrb[0].mxu0
    %v436 = vpop.f32.mrb[0].mxu0
    %v437 = vadd.f32 0.0, %v436
    %v438 = vpop.f32.mrb[0].mxu0
    %439 = vmatprep.mubr.bf16.mxu0 0
    %440 = vmatmul.mubr.bf16.gmra.mrb[0].mxu0 %v328
    %v441 = vpop.f32.mrb[0].mxu0
    %v442 = vadd.f32 0.0, %v441
    %v443 = vpop.f32.mrb[0].mxu0
    %v444 = vpop.f32.mrb[0].mxu0
    %v445 = vadd.f32 0.0, %v444
    %v446 = vpop.f32.mrb[0].mxu0
    %447 = vmatprep.mubr.bf16.mxu0 0
    %448 = vmatmul.mubr.bf16.gmra.mrb[0].mxu0 %v329
    %v449 = vpop.f32.mrb[0].mxu0
    %v450 = vadd.f32 0.0, %v449
    %v451 = vpop.f32.mrb[0].mxu0
    %v452 = vpop.f32.mrb[0].mxu0
    %v453 = vadd.f32 0.0, %v452
    %v454 = vpop.f32.mrb[0].mxu0
    %455 = vmatprep.mubr.bf16.mxu0 0
    %456 = vmatmul.mubr.bf16.gmra.mrb[0].mxu0 %v330
    %v457 = vpop.f32.mrb[0].mxu0
    %v458 = vadd.f32 0.0, %v457
    %v459 = vpop.f32.mrb[0].mxu0
    %v460 = vpop.f32.mrb[0].mxu0
    %v461 = vadd.f32 0.0, %v460
    %v462 = vpop.f32.mrb[0].mxu0
    %463 = vmatprep.mubr.bf16.mxu0 0
    %464 = vmatmul.mubr.bf16.gmra.mrb[0].mxu0 %v331
    %v465 = vpop.f32.mrb[0].mxu0
    %v466 = vadd.f32 0.0, %v465
    %v467 = vpop.f32.mrb[0].mxu0
    %v468 = vpop.f32.mrb[0].mxu0
    %v469 = vadd.f32 0.0, %v468
    %v470 = vpop.f32.mrb[0].mxu0
    %471 = vmatprep.mubr.bf16.mxu0 0
    %472 = vmatmul.mubr.bf16.gmra.mrb[0].mxu0 %v332
    %v473 = vpop.f32.mrb[0].mxu0
    %v474 = vadd.f32 0.0, %v473
    %v475 = vpop.f32.mrb[0].mxu0
    %v476 = vpop.f32.mrb[0].mxu0
    %v477 = vadd.f32 0.0, %v476
    %v478 = vpop.f32.mrb[0].mxu0
    %479 = vmatprep.mubr.bf16.mxu0 0
    %480 = vmatmul.mubr.bf16.gmra.mrb[0].mxu0 %v333
    %v481 = vpop.f32.mrb[0].mxu0
    %v482 = vadd.f32 0.0, %v481
    %v483 = vpop.f32.mrb[0].mxu0
    %v484 = vpop.f32.mrb[0].mxu0
    %v485 = vadd.f32 0.0, %v484
    %v486 = vpop.f32.mrb[0].mxu0
    %487 = vmatprep.mubr.bf16.mxu0 0
    %488 = vmatmul.mubr.bf16.gmra.mrb[0].mxu0 %v334
    %v489 = vpop.f32.mrb[0].mxu0
    %v490 = vadd.f32 0.0, %v489
    %v491 = vpop.f32.mrb[0].mxu0
    %v492 = vpop.f32.mrb[0].mxu0
    %v493 = vadd.f32 0.0, %v492
    %v494 = vpop.f32.mrb[0].mxu0
    %495 = vdwg.mxu0
    %v496 = vpack.c.bf16 %v437, %v434
    %v497 = vpack.c.bf16 %v445, %v442
    %v498 = vpack.c.bf16 %v453, %v450
    %v499 = vpack.c.bf16 %v461, %v458
    %v500 = vpack.c.bf16 %v469, %v466
    %v501 = vpack.c.bf16 %v477, %v474
    %v502 = vpack.c.bf16 %v485, %v482
    %v503 = vpack.c.bf16 %v493, %v490
    %v504 = vld [vmem:[%s4] sm:$0x1]
    %v506 = vlaneseq
    %v507 = vshrl.u32 %v506, 7
    %v508 = vsub.s32 0, %v507
    %v509 = vrot.slane %v504, %v508
    %511 = vmatprep.subr.bf16.mxu0 0
    %512 = vmatpush1.bf16.msra.mxu0 %v496
    %513 = vmatprep.subr.bf16.mxu0 0
    %514 = vmatpush1.bf16.msra.mxu0 %v497
    %515 = vmatprep.subr.bf16.mxu0 0
    %516 = vmatpush1.bf16.msra.mxu0 %v498
    %517 = vmatprep.subr.bf16.mxu0 0
    %518 = vmatpush1.bf16.msra.mxu0 %v499
    %519 = vmatprep.subr.bf16.mxu0 0
    %520 = vmatpush1.bf16.msra.mxu0 %v500
    %521 = vmatprep.subr.bf16.mxu0 0
    %522 = vmatpush1.bf16.msra.mxu0 %v501
    %523 = vmatprep.subr.bf16.mxu0 0
    %524 = vmatpush1.bf16.msra.mxu0 %v502
    %525 = vmatprep.subr.bf16.mxu0 0
    %526 = vmatpush1.bf16.msra.mxu0 %v503
    %527 = vmatprep.subr.bf16.mxu0 0
    %528 = vmatpush1.bf16.msra.mxu0 0
    %529 = vmatprep.subr.bf16.mxu0 0
    %530 = vmatpush1.bf16.msra.mxu0 0
    %531 = vmatprep.subr.bf16.mxu0 0
    %532 = vmatpush1.bf16.msra.mxu0 0
    %533 = vmatprep.subr.bf16.mxu0 0
    %534 = vmatpush1.bf16.msra.mxu0 0
    %535 = vmatprep.subr.bf16.mxu0 0
    %536 = vmatpush1.bf16.msra.mxu0 0
    %537 = vmatprep.subr.bf16.mxu0 0
    %538 = vmatpush1.bf16.msra.mxu0 0
    %539 = vmatprep.subr.bf16.mxu0 0
    %540 = vmatpush1.bf16.msra.mxu0 0
    %541 = vmatprep.subr.bf16.mxu0 0
    %542 = vmatpush1.bf16.msra.mxu0 0
    %543 = vmatprep.mubr.bf16.mxu0 0
    %544 = vmatmul.mubr.bf16.gmra.mrb[0].mxu0 %v134
    %v545 = vpop.f32.mrb[0].mxu0
    %v546 = vadd.f32 %v509, %v545
    %v547 = vpop.f32.mrb[0].mxu0
    %v548 = vpop.f32.mrb[0].mxu0
    %v549 = vadd.f32 %v509, %v548
    %v550 = vpop.f32.mrb[0].mxu0
    %551 = vmatprep.mubr.bf16.mxu0 0
    %552 = vmatmul.mubr.bf16.gmra.mrb[0].mxu0 %v135
    %v553 = vpop.f32.mrb[0].mxu0
    %v554 = vadd.f32 %v509, %v553
    %v555 = vpop.f32.mrb[0].mxu0
    %v556 = vpop.f32.mrb[0].mxu0
    %v557 = vadd.f32 %v509, %v556
    %v558 = vpop.f32.mrb[0].mxu0
    %559 = vmatprep.mubr.bf16.mxu0 0
    %560 = vmatmul.mubr.bf16.gmra.mrb[0].mxu0 %v136
    %v561 = vpop.f32.mrb[0].mxu0
    %v562 = vadd.f32 %v509, %v561
    %v563 = vpop.f32.mrb[0].mxu0
    %v564 = vpop.f32.mrb[0].mxu0
    %v565 = vadd.f32 %v509, %v564
    %v566 = vpop.f32.mrb[0].mxu0
    %567 = vmatprep.mubr.bf16.mxu0 0
    %568 = vmatmul.mubr.bf16.gmra.mrb[0].mxu0 %v137
    %v569 = vpop.f32.mrb[0].mxu0
    %v570 = vadd.f32 %v509, %v569
    %v571 = vpop.f32.mrb[0].mxu0
    %v572 = vpop.f32.mrb[0].mxu0
    %v573 = vadd.f32 %v509, %v572
    %v574 = vpop.f32.mrb[0].mxu0
    %575 = vmatprep.mubr.bf16.mxu0 0
    %576 = vmatmul.mubr.bf16.gmra.mrb[0].mxu0 %v138
    %v577 = vpop.f32.mrb[0].mxu0
    %v578 = vadd.f32 %v509, %v577
    %v579 = vpop.f32.mrb[0].mxu0
    %v580 = vpop.f32.mrb[0].mxu0
    %v581 = vadd.f32 %v509, %v580
    %v582 = vpop.f32.mrb[0].mxu0
    %583 = vmatprep.mubr.bf16.mxu0 0
    %584 = vmatmul.mubr.bf16.gmra.mrb[0].mxu0 %v139
    %v585 = vpop.f32.mrb[0].mxu0
    %v586 = vadd.f32 %v509, %v585
    %v587 = vpop.f32.mrb[0].mxu0
    %v588 = vpop.f32.mrb[0].mxu0
    %v589 = vadd.f32 %v509, %v588
    %v590 = vpop.f32.mrb[0].mxu0
    %591 = vmatprep.mubr.bf16.mxu0 0
    %592 = vmatmul.mubr.bf16.gmra.mrb[0].mxu0 %v140
    %v593 = vpop.f32.mrb[0].mxu0
    %v594 = vadd.f32 %v509, %v593
    %v595 = vpop.f32.mrb[0].mxu0
    %v596 = vpop.f32.mrb[0].mxu0
    %v597 = vadd.f32 %v509, %v596
    %v598 = vpop.f32.mrb[0].mxu0
    %599 = vmatprep.mubr.bf16.mxu0 0
    %600 = vmatmul.mubr.bf16.gmra.mrb[0].mxu0 %v141
    %v601 = vpop.f32.mrb[0].mxu0
    %v602 = vadd.f32 %v509, %v601
    %v603 = vpop.f32.mrb[0].mxu0
    %v604 = vpop.f32.mrb[0].mxu0
    %v605 = vadd.f32 %v509, %v604
    %v606 = vpop.f32.mrb[0].mxu0
    %607 = vdwg.mxu0
    %608 = vst [vmem:[#allocation9] sm:$0xff] %v546
    %609 = vst [vmem:[#allocation9 + $0x8] sm:$0xff] %v549
    %610 = vst [vmem:[#allocation9 + $0x10] sm:$0xff] %v554
    %611 = vst [vmem:[#allocation9 + $0x18] sm:$0xff] %v557
    %612 = vst [vmem:[#allocation9 + $0x20] sm:$0xff] %v562
    %613 = vst [vmem:[#allocation9 + $0x28] sm:$0xff] %v565
    %614 = vst [vmem:[#allocation9 + $0x30] sm:$0xff] %v570
    %615 = vst [vmem:[#allocation9 + $0x38] sm:$0xff] %v573
    %616 = vst [vmem:[#allocation9 + $0x40] sm:$0xff] %v578
    %617 = vst [vmem:[#allocation9 + $0x48] sm:$0xff] %v581
    %618 = vst [vmem:[#allocation9 + $0x50] sm:$0xff] %v586
    %619 = vst [vmem:[#allocation9 + $0x58] sm:$0xff] %v589
    %620 = vst [vmem:[#allocation9 + $0x60] sm:$0xff] %v594
    %621 = vst [vmem:[#allocation9 + $0x68] sm:$0xff] %v597
    %622 = vst [vmem:[#allocation9 + $0x70] sm:$0xff] %v602
    %623 = vst [vmem:[#allocation9 + $0x78] sm:$0xff] %v605
    // Predicated region
    $region34: #{tpu_custom_call.1} parent=1 // pred_check
      _
    $region35: #{tpu_custom_call.1} parent=1 // pred_check_branch
      %625 = sbr.rel (0) target = $region37
    $region36: #{tpu_custom_call.1} parent=1 // pred_region
      %s627 = ssub.s32 2048, 2048
      %628 = vsyncadd [#allocation5], %s627
      %s629 = sshll.u32 [#allocation9], 4
      %s630 = int_to_ptr.vmem [resolvable:$true] %s629
      %635 = dma.vmem_to_hbm [thread:$0]  %s630, 2048, %s5, [#allocation5], 128, 128, 8
    $region37: #{tpu_custom_call.1} parent=1 // pred_fallthru
      _
    // Predicated region
    $region38: #{tpu_custom_call.1} parent=1 // pred_check
      _
    $region39: #{tpu_custom_call.1} parent=1 // pred_check_branch
      %637 = sbr.rel (0) target = $region41
    $region40: #{tpu_custom_call.1} parent=1 // pred_region
      %638 = dma.done [#allocation5], 2048
    $region41: #{tpu_custom_call.1} parent=1 // pred_fallthru
      _
    %639 = vsyncpa [#allocation4], 1
    %640 = vsyncpa [#allocation7], 1
    %641 = vsyncpa [#allocation5], 1

</llo_original>
